<compile_context>
chip_gen: v7x
topology: tpu7x:2x2x1
jax: 0.10.0
libtpu: 0.0.40
codegen_flags: <defaults>
</compile_context>

<pallas_src>
import functools

import jax
import jax.numpy as jnp
from jax import lax
from jax.experimental import pallas as pl
from jax.experimental.pallas import tpu as pltpu


def _round_up(x, m):
    return (x + m - 1) // m * m


def _pick_batch_tile(b_pad):
    # Prefer >= 2 batch tiles (so the "parallel" axis shards across v7x's two
    # TensorCores) while keeping the MXU M-dim reasonably full; cap at 128.
    for cand in (128, 64, 32, 16, 8):
        if b_pad % cand == 0 and b_pad // cand >= 2:
            return cand
    return b_pad


def _pad2(a, rows, cols):
    return jnp.pad(a, ((0, rows - a.shape[0]), (0, cols - a.shape[1])))


def _vmem_estimate(t_chunk, b_tile, h_pad, c_pad, x_item):
    """Accurate-ish VMEM accounting for the chosen tiling (bytes)."""
    xe_chunk = 2 * t_chunk * b_tile * h_pad * x_item            # xe (2 bufs)
    weights = (2 * h_pad * h_pad + h_pad * c_pad) * x_item      # Buffered(1)
    biases = (h_pad + c_pad) * 4
    out = 2 * b_tile * c_pad * 4                                # out (2 bufs)
    scratch = (2 * b_tile * h_pad * 4                           # h / m
               + t_chunk * b_tile * h_pad * 4)                  # xproj (f32)
    # 25% headroom + 2 MiB for in-kernel temporaries (dot results, casts).
    return int(1.25 * (xe_chunk + weights + biases + out + scratch)) + (2 << 20)


def _rnn_text_cls_kernel(xe_ref, wih_ref, whh_ref, bias_ref, wfc_ref, bfc_ref,
                         out_ref, h_scr, m_scr, xproj_scr, *, t_total):
    """Grid = (batch_tiles [parallel], time_chunks [arbitrary]).

    xe_ref   : (T_CHUNK, B_TILE, H_pad)  one time chunk of the embedded seq
    wih_ref  : (H_pad, H_pad)            input->hidden weight (transposed)
    whh_ref  : (H_pad, H_pad)            hidden->hidden weight (transposed)
    bias_ref : (1, H_pad)                b_ih + b_hh, f32
    wfc_ref  : (H_pad, C_pad)            FC weight (transposed)
    bfc_ref  : (1, C_pad)                FC bias, f32
    out_ref  : (B_TILE, C_pad)           logits (resident across time chunks)
    h_scr/m_scr  : (B_TILE, H_pad) f32   hidden state / running max
    xproj_scr    : (T_CHUNK, B_TILE, H_pad) f32  hoisted input projection
    """
    t_chunk, b_tile, h_pad = xe_ref.shape
    c = pl.program_id(1)
    nc = pl.num_programs(1)

    @pl.when(c == 0)
    def _init():
        h_scr[...] = jnp.zeros_like(h_scr)
        # tanh outputs lie in [-1, 1]; a finite sentinel below that range acts
        # as -inf for the running max without special-value handling.
        m_scr[...] = jnp.full_like(m_scr, -2.0)

    mm_dtype = wih_ref.dtype
    whh = whh_ref[...]
    bias = bias_ref[...]                       # (1, H_pad) f32

    # Hoisted input projection: one big (t_chunk*b_tile, H) @ (H, H) MXU matmul
    # for the whole chunk (bias folded in), stored to VMEM scratch so the
    # serial recurrence below only carries the h @ Whh dependency.
    xe2d = xe_ref[...].reshape(t_chunk * b_tile, h_pad)
    xproj = jnp.dot(xe2d, wih_ref[...], preferred_element_type=jnp.float32) + bias
    xproj_scr[...] = xproj.reshape(t_chunk, b_tile, h_pad)

    tail = t_total % t_chunk  # static

    def step(i, carry):
        h, m = carry
        pre = (xproj_scr[i]
               + jnp.dot(h.astype(mm_dtype), whh,
                         preferred_element_type=jnp.float32))
        h_new = jnp.tanh(pre)
        if tail != 0:
            # Only padded steps on the final chunk are invalid; mask only the
            # running max (h is never consumed past the last valid step).
            valid = (c * t_chunk + i) < t_total
            m = jnp.where(valid, jnp.maximum(m, h_new), m)
        else:
            m = jnp.maximum(m, h_new)
        return h_new, m

    h, m = lax.fori_loop(0, t_chunk, step, (h_scr[...], m_scr[...]),
                         unroll=min(8, t_chunk))

    h_scr[...] = h
    m_scr[...] = m

    @pl.when(c == nc - 1)
    def _finalize():
        logits = (jnp.dot(m.astype(mm_dtype), wfc_ref[...],
                          preferred_element_type=jnp.float32)
                  + bfc_ref[...])
        out_ref[...] = logits.astype(out_ref.dtype)


def rnn_text_classification(tokens, params, *, matmul_dtype=jnp.bfloat16,
                            t_chunk=32):
    """tokens: int32 [B, T].  Returns logits [B, num_classes]."""
    emb = params["embedding"]                    # (vocab, H)
    wih = params["w_ih_t"]                       # (H, H)
    whh = params["w_hh_t"]                       # (H, H)
    bias = params["b_ih"] + params["b_hh"]       # (1, H)
    wfc = params["w_fc_t"]                       # (H, C)
    bfc = params["b_fc"]                         # (1, C)

    B, T = tokens.shape
    H = emb.shape[1]
    C = wfc.shape[1]
    x_item = jnp.dtype(matmul_dtype).itemsize

    # Hardware-aligned padded shapes.
    B_pad = _round_up(B, 8)
    H_pad = _round_up(H, 128)
    C_pad = _round_up(C, 128)
    B_TILE = _pick_batch_tile(B_pad)
    nb = B_pad // B_TILE

    # VMEM budget: derive from the actual chip (0.7x capacity), fall back to a
    # conservative 64 MiB (v7x) if the query is unavailable.
    try:
        vmem_cap = int(pltpu.get_tpu_info().vmem_capacity_bytes)
    except Exception:
        vmem_cap = 64 * 1024 * 1024
    vmem_budget = int(0.7 * vmem_cap)

    # Time-chunk size: as large as requested, shrunk to fit the VMEM budget.
    T_CHUNK = max(1, min(t_chunk, T))
    while (T_CHUNK > 8
           and _vmem_estimate(T_CHUNK, B_TILE, H_pad, C_pad, x_item)
           > vmem_budget):
        T_CHUNK //= 2
    T_pad = _round_up(T, T_CHUNK)
    nc = T_pad // T_CHUNK

    est = _vmem_estimate(T_CHUNK, B_TILE, H_pad, C_pad, x_item)
    vmem_limit = int(min(max(est, 32 * 1024 * 1024), vmem_budget))

    # Embedding lookup (plain-JAX gather glue), cast to the matmul dtype FIRST
    # so the materialized xe stream is 2 B/elem in bf16 mode, then time-major
    # and padded.  Zero padding keeps padded lanes/rows/steps inert.
    xe = jnp.take(emb.astype(matmul_dtype), tokens, axis=0)  # (B, T, H)
    xe = jnp.transpose(xe, (1, 0, 2))                        # (T, B, H)
    xe = jnp.pad(xe, ((0, T_pad - T), (0, B_pad - B), (0, H_pad - H)))

    wih_p = _pad2(wih, H_pad, H_pad).astype(matmul_dtype)
    whh_p = _pad2(whh, H_pad, H_pad).astype(matmul_dtype)
    wfc_p = _pad2(wfc, H_pad, C_pad).astype(matmul_dtype)
    bias_p = _pad2(bias, 1, H_pad).astype(jnp.float32)
    bfc_p = _pad2(bfc, 1, C_pad).astype(jnp.float32)

    kernel = functools.partial(_rnn_text_cls_kernel, t_total=T)

    # Constant operands: single-buffer (index_map is always (0, 0)).
    const_buf = pl.Buffered(1)

    out_padded = pl.pallas_call(
        kernel,
        out_shape=jax.ShapeDtypeStruct((B_pad, C_pad), jnp.float32),
        grid_spec=pltpu.PrefetchScalarGridSpec(
            num_scalar_prefetch=0,
            grid=(nb, nc),
            in_specs=[
                pl.BlockSpec((T_CHUNK, B_TILE, H_pad), lambda b, c: (c, b, 0)),
                pl.BlockSpec((H_pad, H_pad), lambda b, c: (0, 0),
                             pipeline_mode=const_buf),
                pl.BlockSpec((H_pad, H_pad), lambda b, c: (0, 0),
                             pipeline_mode=const_buf),
                pl.BlockSpec((1, H_pad), lambda b, c: (0, 0),
                             pipeline_mode=const_buf),
                pl.BlockSpec((H_pad, C_pad), lambda b, c: (0, 0),
                             pipeline_mode=const_buf),
                pl.BlockSpec((1, C_pad), lambda b, c: (0, 0),
                             pipeline_mode=const_buf),
            ],
            out_specs=pl.BlockSpec((B_TILE, C_pad), lambda b, c: (b, 0)),
            scratch_shapes=[
                pltpu.VMEM((B_TILE, H_pad), jnp.float32),            # h
                pltpu.VMEM((B_TILE, H_pad), jnp.float32),            # run max
                pltpu.VMEM((T_CHUNK, B_TILE, H_pad), jnp.float32),   # xproj
            ],
        ),
        compiler_params=pltpu.CompilerParams(
            dimension_semantics=("parallel", "arbitrary"),
            vmem_limit_bytes=vmem_limit,
        ),
    )(xe, wih_p, whh_p, bias_p, wfc_p, bfc_p)

    return out_padded[:B, :C]


def init_params(key, vocab_size, hidden_size, num_classes):
    """Deterministic synthetic parameters (shapes match the PyTorch module)."""
    ks = jax.random.split(key, 7)
    scale = 1.0 / jnp.sqrt(hidden_size)
    # nn.Embedding(vocab, H)
    embedding = jax.random.normal(ks[0], (vocab_size, hidden_size), jnp.float32)
    # nn.RNN(input_size=H, hidden=H): weight_ih (H, H_in), weight_hh (H, H)
    w_ih = jax.random.uniform(ks[1], (hidden_size, hidden_size), jnp.float32,
                              -scale, scale)
    w_hh = jax.random.uniform(ks[2], (hidden_size, hidden_size), jnp.float32,
                              -scale, scale)
    b_ih = jax.random.uniform(ks[3], (hidden_size,), jnp.float32, -scale, scale)
    b_hh = jax.random.uniform(ks[4], (hidden_size,), jnp.float32, -scale, scale)
    # nn.Linear(H, num_classes): weight (C, H), bias (C,)
    w_fc = jax.random.uniform(ks[5], (num_classes, hidden_size), jnp.float32,
                              -scale, scale)
    b_fc = jax.random.uniform(ks[6], (num_classes,), jnp.float32, -scale, scale)

    return {
        "embedding": embedding,
        "w_ih_t": w_ih.T,                        # (H_in, H)
        "w_hh_t": w_hh.T,                        # (H, H)
        "b_ih": b_ih.reshape(1, hidden_size),
        "b_hh": b_hh.reshape(1, hidden_size),
        "w_fc_t": w_fc.T,                        # (H, C)
        "b_fc": b_fc.reshape(1, num_classes),
    }


def _reference_forward(tokens, params):
    """Pure-JAX reference of the PyTorch forward, for a sanity check."""
    xe = jnp.take(params["embedding"], tokens, axis=0)   # (B, T, H)
    B, T, H = xe.shape
    h = jnp.zeros((B, H), jnp.float32)
    bias = params["b_ih"] + params["b_hh"]
    outs = []
    for t in range(T):
        h = jnp.tanh(xe[:, t, :] @ params["w_ih_t"]
                     + h @ params["w_hh_t"] + bias)
        outs.append(h)
    out = jnp.max(jnp.stack(outs, axis=1), axis=1)        # (B, H)
    return out @ params["w_fc_t"] + params["b_fc"]


if __name__ == "__main__":
    # Small, module-consistent shapes: batch=2, seq=8, hidden=32, vocab=50, classes=4.
    B, T = 2, 8
    VOCAB, HIDDEN, NUM_CLASSES = 50, 32, 4

    key = jax.random.PRNGKey(0)
    k_tok, k_par = jax.random.split(key)
    tokens = jax.random.randint(k_tok, (B, T), 0, VOCAB, dtype=jnp.int32)
    params = init_params(k_par, VOCAB, HIDDEN, NUM_CLASSES)

    ref = _reference_forward(tokens, params)

    # f32 MXU mode: tight numerical check against the pure-JAX reference.
    logits_f32 = jax.block_until_ready(
        rnn_text_classification(tokens, params, matmul_dtype=jnp.float32))
    assert logits_f32.shape == (B, NUM_CLASSES)
    assert jnp.allclose(logits_f32, ref, atol=1e-4, rtol=1e-4)

    # Default bf16 MXU mode (f32 accumulation): looser tolerance.
    logits_bf16 = jax.block_until_ready(rnn_text_classification(tokens, params))
    assert logits_bf16.shape == (B, NUM_CLASSES)
    assert jnp.allclose(logits_bf16, ref, atol=5e-2, rtol=5e-2)

    print("KERNEL_OK")
</pallas_src>

<mosaic_0001>
module attributes {stable_mosaic.version = 11 : i64} {
  func.func @_rnn_text_cls_kernel(%arg0: i32, %arg1: i32, %arg2: memref<8x8x128xf32, #tpu.memory_space<vmem>>, %arg3: memref<128x128xf32, #tpu.memory_space<vmem>>, %arg4: memref<128x128xf32, #tpu.memory_space<vmem>>, %arg5: memref<1x128xf32, #tpu.memory_space<vmem>>, %arg6: memref<128x128xf32, #tpu.memory_space<vmem>>, %arg7: memref<1x128xf32, #tpu.memory_space<vmem>>, %arg8: memref<8x128xf32, #tpu.memory_space<vmem>>, %arg9: memref<8x128xf32, #tpu.memory_space<vmem>>, %arg10: memref<8x128xf32, #tpu.memory_space<vmem>>, %arg11: memref<8x8x128xf32, #tpu.memory_space<vmem>>) attributes {dimension_semantics = [#tpu.dimension_semantics<parallel>, #tpu.dimension_semantics<arbitrary>], iteration_bounds = array<i64: 1, 1>, scalar_prefetch = 0 : i64, scratch_operands = 3 : i64, tpu.core_type = #tpu.core_type<tc>, window_params = [{transform_indices = @transform_0, window_bounds = array<i64: 8, 8, 128>}, {pipeline_mode = #tpu.pipeline_mode<synchronous>, transform_indices = @transform_1, window_bounds = array<i64: 128, 128>}, {pipeline_mode = #tpu.pipeline_mode<synchronous>, transform_indices = @transform_2, window_bounds = array<i64: 128, 128>}, {pipeline_mode = #tpu.pipeline_mode<synchronous>, transform_indices = @transform_3, window_bounds = array<i64: 1, 128>}, {pipeline_mode = #tpu.pipeline_mode<synchronous>, transform_indices = @transform_4, window_bounds = array<i64: 128, 128>}, {pipeline_mode = #tpu.pipeline_mode<synchronous>, transform_indices = @transform_5, window_bounds = array<i64: 1, 128>}, {transform_indices = @transform_6, window_bounds = array<i64: 8, 128>}]} {
    %c0_i32 = arith.constant 0 : i32
    %0 = arith.cmpi eq, %arg1, %c0_i32 : i32
    %1 = arith.extui %0 : i1 to i32
    %c0_i32_0 = arith.constant 0 : i32
    %2 = arith.cmpi ne, %1, %c0_i32_0 : i32
    scf.if %2 {
      %cst_47 = arith.constant 0.000000e+00 : f32
      %76 = vector.broadcast %cst_47 : f32 to vector<8x128xf32>
      %c0_48 = arith.constant 0 : index
      %c0_49 = arith.constant 0 : index
      %77 = vector.load %arg9[%c0_48, %c0_49] : memref<8x128xf32, #tpu.memory_space<vmem>>, vector<8x128xf32>
      tpu.vector_store %arg9[%c0_48, %c0_49], %76 {strides = array<i32>} : memref<8x128xf32, #tpu.memory_space<vmem>>, vector<8x128xf32>,
      %cst_50 = arith.constant -2.000000e+00 : f32
      %78 = vector.broadcast %cst_50 : f32 to vector<8x128xf32>
      %c0_51 = arith.constant 0 : index
      %c0_52 = arith.constant 0 : index
      %79 = vector.load %arg10[%c0_51, %c0_52] : memref<8x128xf32, #tpu.memory_space<vmem>>, vector<8x128xf32>
      tpu.vector_store %arg10[%c0_51, %c0_52], %78 {strides = array<i32>} : memref<8x128xf32, #tpu.memory_space<vmem>>, vector<8x128xf32>,
    } else {
    }
    %c0 = arith.constant 0 : index
    %c0_1 = arith.constant 0 : index
    %3 = vector.load %arg4[%c0, %c0_1] : memref<128x128xf32, #tpu.memory_space<vmem>>, vector<128x128xf32>
    %c0_2 = arith.constant 0 : index
    %c0_3 = arith.constant 0 : index
    %4 = vector.load %arg5[%c0_2, %c0_3] : memref<1x128xf32, #tpu.memory_space<vmem>>, vector<1x128xf32>
    %c0_4 = arith.constant 0 : index
    %c0_5 = arith.constant 0 : index
    %c0_6 = arith.constant 0 : index
    %5 = vector.load %arg2[%c0_4, %c0_5, %c0_6] : memref<8x8x128xf32, #tpu.memory_space<vmem>>, vector<8x8x128xf32>
    %6 = vector.shape_cast %5 : vector<8x8x128xf32> to vector<64x128xf32>
    %c0_7 = arith.constant 0 : index
    %c0_8 = arith.constant 0 : index
    %7 = vector.load %arg3[%c0_7, %c0_8] : memref<128x128xf32, #tpu.memory_space<vmem>>, vector<128x128xf32>
    %cst = arith.constant dense<0.000000e+00> : vector<64x128xf32>
    %8 = tpu.matmul %6, %7, %cst {dimension_numbers = #tpu.dot_dimension_numbers<[1], [0], [0], [1], [0, 0, 1, 1], [], []>} : vector<64x128xf32>, vector<128x128xf32>, vector<64x128xf32> -> vector<64x128xf32>
    %9 = vector.broadcast %4 : vector<1x128xf32> to vector<64x128xf32>
    %10 = arith.addf %8, %9 : vector<64x128xf32>
    %11 = vector.shape_cast %10 : vector<64x128xf32> to vector<8x8x128xf32>
    %c0_9 = arith.constant 0 : index
    %c0_10 = arith.constant 0 : index
    %c0_11 = arith.constant 0 : index
    %12 = vector.load %arg11[%c0_9, %c0_10, %c0_11] : memref<8x8x128xf32, #tpu.memory_space<vmem>>, vector<8x8x128xf32>
    tpu.vector_store %arg11[%c0_9, %c0_10, %c0_11], %11 {strides = array<i32>} : memref<8x8x128xf32, #tpu.memory_space<vmem>>, vector<8x8x128xf32>,
    %c0_12 = arith.constant 0 : index
    %c0_13 = arith.constant 0 : index
    %13 = vector.load %arg9[%c0_12, %c0_13] : memref<8x128xf32, #tpu.memory_space<vmem>>, vector<8x128xf32>
    %c0_14 = arith.constant 0 : index
    %c0_15 = arith.constant 0 : index
    %14 = vector.load %arg10[%c0_14, %c0_15] : memref<8x128xf32, #tpu.memory_space<vmem>>, vector<8x128xf32>
    %c0_i32_16 = arith.constant 0 : i32
    %15 = arith.index_cast %c0_i32_16 : i32 to index
    %c0_17 = arith.constant 0 : index
    %c0_18 = arith.constant 0 : index
    %16 = vector.load %arg11[%15, %c0_17, %c0_18] : memref<8x8x128xf32, #tpu.memory_space<vmem>>, vector<1x8x128xf32>
    %17 = vector.shape_cast %16 : vector<1x8x128xf32> to vector<8x128xf32>
    %cst_19 = arith.constant dense<0.000000e+00> : vector<8x128xf32>
    %18 = tpu.matmul %13, %3, %cst_19 {dimension_numbers = #tpu.dot_dimension_numbers<[1], [0], [0], [1], [0, 0, 1, 1], [], []>} : vector<8x128xf32>, vector<128x128xf32>, vector<8x128xf32> -> vector<8x128xf32>
    %19 = arith.addf %17, %18 : vector<8x128xf32>
    %20 = math.tanh %19 : vector<8x128xf32>
    %21 = arith.maximumf %14, %20 : vector<8x128xf32>
    %c1_i32 = arith.constant 1 : i32
    %22 = arith.index_cast %c1_i32 : i32 to index
    %c0_20 = arith.constant 0 : index
    %c0_21 = arith.constant 0 : index
    %23 = vector.load %arg11[%22, %c0_20, %c0_21] : memref<8x8x128xf32, #tpu.memory_space<vmem>>, vector<1x8x128xf32>
    %24 = vector.shape_cast %23 : vector<1x8x128xf32> to vector<8x128xf32>
    %cst_22 = arith.constant dense<0.000000e+00> : vector<8x128xf32>
    %25 = tpu.matmul %20, %3, %cst_22 {dimension_numbers = #tpu.dot_dimension_numbers<[1], [0], [0], [1], [0, 0, 1, 1], [], []>} : vector<8x128xf32>, vector<128x128xf32>, vector<8x128xf32> -> vector<8x128xf32>
    %26 = arith.addf %24, %25 : vector<8x128xf32>
    %27 = math.tanh %26 : vector<8x128xf32>
    %28 = arith.maximumf %21, %27 : vector<8x128xf32>
    %c2_i32 = arith.constant 2 : i32
    %29 = arith.index_cast %c2_i32 : i32 to index
    %c0_23 = arith.constant 0 : index
    %c0_24 = arith.constant 0 : index
    %30 = vector.load %arg11[%29, %c0_23, %c0_24] : memref<8x8x128xf32, #tpu.memory_space<vmem>>, vector<1x8x128xf32>
    %31 = vector.shape_cast %30 : vector<1x8x128xf32> to vector<8x128xf32>
    %cst_25 = arith.constant dense<0.000000e+00> : vector<8x128xf32>
    %32 = tpu.matmul %27, %3, %cst_25 {dimension_numbers = #tpu.dot_dimension_numbers<[1], [0], [0], [1], [0, 0, 1, 1], [], []>} : vector<8x128xf32>, vector<128x128xf32>, vector<8x128xf32> -> vector<8x128xf32>
    %33 = arith.addf %31, %32 : vector<8x128xf32>
    %34 = math.tanh %33 : vector<8x128xf32>
    %35 = arith.maximumf %28, %34 : vector<8x128xf32>
    %c3_i32 = arith.constant 3 : i32
    %36 = arith.index_cast %c3_i32 : i32 to index
    %c0_26 = arith.constant 0 : index
    %c0_27 = arith.constant 0 : index
    %37 = vector.load %arg11[%36, %c0_26, %c0_27] : memref<8x8x128xf32, #tpu.memory_space<vmem>>, vector<1x8x128xf32>
    %38 = vector.shape_cast %37 : vector<1x8x128xf32> to vector<8x128xf32>
    %cst_28 = arith.constant dense<0.000000e+00> : vector<8x128xf32>
    %39 = tpu.matmul %34, %3, %cst_28 {dimension_numbers = #tpu.dot_dimension_numbers<[1], [0], [0], [1], [0, 0, 1, 1], [], []>} : vector<8x128xf32>, vector<128x128xf32>, vector<8x128xf32> -> vector<8x128xf32>
    %40 = arith.addf %38, %39 : vector<8x128xf32>
    %41 = math.tanh %40 : vector<8x128xf32>
    %42 = arith.maximumf %35, %41 : vector<8x128xf32>
    %c4_i32 = arith.constant 4 : i32
    %43 = arith.index_cast %c4_i32 : i32 to index
    %c0_29 = arith.constant 0 : index
    %c0_30 = arith.constant 0 : index
    %44 = vector.load %arg11[%43, %c0_29, %c0_30] : memref<8x8x128xf32, #tpu.memory_space<vmem>>, vector<1x8x128xf32>
    %45 = vector.shape_cast %44 : vector<1x8x128xf32> to vector<8x128xf32>
    %cst_31 = arith.constant dense<0.000000e+00> : vector<8x128xf32>
    %46 = tpu.matmul %41, %3, %cst_31 {dimension_numbers = #tpu.dot_dimension_numbers<[1], [0], [0], [1], [0, 0, 1, 1], [], []>} : vector<8x128xf32>, vector<128x128xf32>, vector<8x128xf32> -> vector<8x128xf32>
    %47 = arith.addf %45, %46 : vector<8x128xf32>
    %48 = math.tanh %47 : vector<8x128xf32>
    %49 = arith.maximumf %42, %48 : vector<8x128xf32>
    %c5_i32 = arith.constant 5 : i32
    %50 = arith.index_cast %c5_i32 : i32 to index
    %c0_32 = arith.constant 0 : index
    %c0_33 = arith.constant 0 : index
    %51 = vector.load %arg11[%50, %c0_32, %c0_33] : memref<8x8x128xf32, #tpu.memory_space<vmem>>, vector<1x8x128xf32>
    %52 = vector.shape_cast %51 : vector<1x8x128xf32> to vector<8x128xf32>
    %cst_34 = arith.constant dense<0.000000e+00> : vector<8x128xf32>
    %53 = tpu.matmul %48, %3, %cst_34 {dimension_numbers = #tpu.dot_dimension_numbers<[1], [0], [0], [1], [0, 0, 1, 1], [], []>} : vector<8x128xf32>, vector<128x128xf32>, vector<8x128xf32> -> vector<8x128xf32>
    %54 = arith.addf %52, %53 : vector<8x128xf32>
    %55 = math.tanh %54 : vector<8x128xf32>
    %56 = arith.maximumf %49, %55 : vector<8x128xf32>
    %c6_i32 = arith.constant 6 : i32
    %57 = arith.index_cast %c6_i32 : i32 to index
    %c0_35 = arith.constant 0 : index
    %c0_36 = arith.constant 0 : index
    %58 = vector.load %arg11[%57, %c0_35, %c0_36] : memref<8x8x128xf32, #tpu.memory_space<vmem>>, vector<1x8x128xf32>
    %59 = vector.shape_cast %58 : vector<1x8x128xf32> to vector<8x128xf32>
    %cst_37 = arith.constant dense<0.000000e+00> : vector<8x128xf32>
    %60 = tpu.matmul %55, %3, %cst_37 {dimension_numbers = #tpu.dot_dimension_numbers<[1], [0], [0], [1], [0, 0, 1, 1], [], []>} : vector<8x128xf32>, vector<128x128xf32>, vector<8x128xf32> -> vector<8x128xf32>
    %61 = arith.addf %59, %60 : vector<8x128xf32>
    %62 = math.tanh %61 : vector<8x128xf32>
    %63 = arith.maximumf %56, %62 : vector<8x128xf32>
    %c7_i32 = arith.constant 7 : i32
    %64 = arith.index_cast %c7_i32 : i32 to index
    %c0_38 = arith.constant 0 : index
    %c0_39 = arith.constant 0 : index
    %65 = vector.load %arg11[%64, %c0_38, %c0_39] : memref<8x8x128xf32, #tpu.memory_space<vmem>>, vector<1x8x128xf32>
    %66 = vector.shape_cast %65 : vector<1x8x128xf32> to vector<8x128xf32>
    %cst_40 = arith.constant dense<0.000000e+00> : vector<8x128xf32>
    %67 = tpu.matmul %62, %3, %cst_40 {dimension_numbers = #tpu.dot_dimension_numbers<[1], [0], [0], [1], [0, 0, 1, 1], [], []>} : vector<8x128xf32>, vector<128x128xf32>, vector<8x128xf32> -> vector<8x128xf32>
    %68 = arith.addf %66, %67 : vector<8x128xf32>
    %69 = math.tanh %68 : vector<8x128xf32>
    %70 = arith.maximumf %63, %69 : vector<8x128xf32>
    %c8_i32 = arith.constant 8 : i32
    %c0_41 = arith.constant 0 : index
    %c0_42 = arith.constant 0 : index
    %71 = vector.load %arg9[%c0_41, %c0_42] : memref<8x128xf32, #tpu.memory_space<vmem>>, vector<8x128xf32>
    tpu.vector_store %arg9[%c0_41, %c0_42], %69 {strides = array<i32>} : memref<8x128xf32, #tpu.memory_space<vmem>>, vector<8x128xf32>,
    %c0_43 = arith.constant 0 : index
    %c0_44 = arith.constant 0 : index
    %72 = vector.load %arg10[%c0_43, %c0_44] : memref<8x128xf32, #tpu.memory_space<vmem>>, vector<8x128xf32>
    tpu.vector_store %arg10[%c0_43, %c0_44], %70 {strides = array<i32>} : memref<8x128xf32, #tpu.memory_space<vmem>>, vector<8x128xf32>,
    %c0_i32_45 = arith.constant 0 : i32
    %73 = arith.cmpi eq, %arg1, %c0_i32_45 : i32
    %74 = arith.extui %73 : i1 to i32
    %c0_i32_46 = arith.constant 0 : i32
    %75 = arith.cmpi ne, %74, %c0_i32_46 : i32
    scf.if %75 {
      %c0_47 = arith.constant 0 : index
      %c0_48 = arith.constant 0 : index
      %76 = vector.load %arg6[%c0_47, %c0_48] : memref<128x128xf32, #tpu.memory_space<vmem>>, vector<128x128xf32>
      %cst_49 = arith.constant dense<0.000000e+00> : vector<8x128xf32>
      %77 = tpu.matmul %70, %76, %cst_49 {dimension_numbers = #tpu.dot_dimension_numbers<[1], [0], [0], [1], [0, 0, 1, 1], [], []>} : vector<8x128xf32>, vector<128x128xf32>, vector<8x128xf32> -> vector<8x128xf32>
      %c0_50 = arith.constant 0 : index
      %c0_51 = arith.constant 0 : index
      %78 = vector.load %arg7[%c0_50, %c0_51] : memref<1x128xf32, #tpu.memory_space<vmem>>, vector<1x128xf32>
      %79 = vector.broadcast %78 : vector<1x128xf32> to vector<8x128xf32>
      %80 = arith.addf %77, %79 : vector<8x128xf32>
      %c0_52 = arith.constant 0 : index
      %c0_53 = arith.constant 0 : index
      %81 = vector.load %arg8[%c0_52, %c0_53] : memref<8x128xf32, #tpu.memory_space<vmem>>, vector<8x128xf32>
      tpu.vector_store %arg8[%c0_52, %c0_53], %80 {strides = array<i32>} : memref<8x128xf32, #tpu.memory_space<vmem>>, vector<8x128xf32>,
    } else {
    }
    return
  }
  func.func @transform_0(%arg0: i32, %arg1: i32) -> (i32, i32, i32) {
    %c0_i32 = arith.constant 0 : i32
    %c0_i32_0 = arith.constant 0 : i32
    return %arg1, %arg0, %c0_i32 : i32, i32, i32
  }
  func.func @transform_1(%arg0: i32, %arg1: i32) -> (i32, i32) {
    %c0_i32 = arith.constant 0 : i32
    %c0_i32_0 = arith.constant 0 : i32
    %c0_i32_1 = arith.constant 0 : i32
    return %c0_i32, %c0_i32_0 : i32, i32
  }
  func.func @transform_2(%arg0: i32, %arg1: i32) -> (i32, i32) {
    %c0_i32 = arith.constant 0 : i32
    %c0_i32_0 = arith.constant 0 : i32
    %c0_i32_1 = arith.constant 0 : i32
    return %c0_i32, %c0_i32_0 : i32, i32
  }
  func.func @transform_3(%arg0: i32, %arg1: i32) -> (i32, i32) {
    %c0_i32 = arith.constant 0 : i32
    %c0_i32_0 = arith.constant 0 : i32
    %c0_i32_1 = arith.constant 0 : i32
    return %c0_i32, %c0_i32_0 : i32, i32
  }
  func.func @transform_4(%arg0: i32, %arg1: i32) -> (i32, i32) {
    %c0_i32 = arith.constant 0 : i32
    %c0_i32_0 = arith.constant 0 : i32
    %c0_i32_1 = arith.constant 0 : i32
    return %c0_i32, %c0_i32_0 : i32, i32
  }
  func.func @transform_5(%arg0: i32, %arg1: i32) -> (i32, i32) {
    %c0_i32 = arith.constant 0 : i32
    %c0_i32_0 = arith.constant 0 : i32
    %c0_i32_1 = arith.constant 0 : i32
    return %c0_i32, %c0_i32_0 : i32, i32
  }
  func.func @transform_6(%arg0: i32, %arg1: i32) -> (i32, i32) {
    %c0_i32 = arith.constant 0 : i32
    %c0_i32_0 = arith.constant 0 : i32
    return %arg0, %c0_i32 : i32, i32
  }
}

</mosaic_0001>

<llo_original>
// kernel: tpu_custom_call.1
$region0: #{tpu_custom_call.1}
  #allocation0 [shape = 'u32[]', space=smem, size = 0x4, offset = 0x4, fixed_abs, tag = 'smem constant byte address 0x4 - core index']
  #allocation1 [shape = 'u32[144,128]{1,0:T(1,128)}', space=vmem, size = 0x12000, scoped, tag = 'internal scratch']
  #allocation2 [shape = 'f32[8,128]{1,0:T(8,128)}', space=vmem, size = 0x1000, scoped, tag = 'scratch operand']
  #allocation3 [shape = 'f32[8,128]{1,0:T(8,128)}', space=vmem, size = 0x1000, scoped, tag = 'scratch operand']
  #allocation4 [shape = 'f32[8,8,128]{2,1,0:T(8,128)}', space=vmem, size = 0x8000, scoped, tag = 'scratch operand']
  %s0 = inlined_call_operand.hbm [shape: f32[8,8,128], index: 0, kind: input, shape index: {}]
  %s1 = inlined_call_operand.hbm [shape: f32[128,128], index: 1, kind: input, shape index: {}]
  %s2 = inlined_call_operand.hbm [shape: f32[128,128], index: 2, kind: input, shape index: {}]
  %s3 = inlined_call_operand.vmem [shape: f32[1,128], index: 3, kind: input, shape index: {}]
  %s4 = inlined_call_operand.hbm [shape: f32[128,128], index: 4, kind: input, shape index: {}]
  %s5 = inlined_call_operand.vmem [shape: f32[1,128], index: 5, kind: input, shape index: {}]
  %s6 = inlined_call_operand.hbm [shape: f32[8,128], index: 6, kind: output, shape index: {}]
  %s7 = sld [smem:[#allocation0]]
  $region58: #{tpu_custom_call.1} parent=0
    _
  %s9 = ssub.s32 1, %s7
  %s10 = scalar_select 0, %s9, %s7
  $region1: #{tpu_custom_call.1} parent=0
    #allocation5 [shape = 'u8[32768]{0}', space=vmem, size = 0x8000, scoped, tag = 'input window, operand 0, single buffered']
    #allocation6 [shape = 's32[1]{0}', space=sflag, size = 0x4, scoped, tag = 'scoped memory for tpu_custom_call.1']
    #allocation7 [shape = 's32[1]{0}', space=sflag, size = 0x4, scoped, tag = 'scoped memory for tpu_custom_call.1']
    #allocation8 [shape = 'u8[65536]{0}', space=vmem, size = 0x10000, scoped, tag = 'input window, operand 1, single buffered']
    #allocation9 [shape = 's32[1]{0}', space=sflag, size = 0x4, scoped, tag = 'scoped memory for tpu_custom_call.1']
    #allocation10 [shape = 'u8[65536]{0}', space=vmem, size = 0x10000, scoped, tag = 'input window, operand 2, single buffered']
    #allocation11 [shape = 'u8[65536]{0}', space=vmem, size = 0x10000, scoped, tag = 'input window, operand 4, single buffered']
    #allocation12 [shape = 's32[1]{0}', space=sflag, size = 0x4, scoped, tag = 'scoped memory for tpu_custom_call.1']
    #allocation13 [shape = 'u8[4096]{0}', space=vmem, size = 0x1000, scoped, tag = 'output window, operand 0, single buffered']
    %11 = vsyncpa [#allocation6], 0
    %12 = vsyncpa [#allocation9], 0
    %13 = vsyncpa [#allocation12], 0
    %14 = vsyncpa [#allocation7], 0
    // Predicated region
    $region2: #{tpu_custom_call.1} parent=1 // pred_check
      _
    $region3: #{tpu_custom_call.1} parent=1 // pred_check_branch
      %16 = sbr.rel (0) target = $region5
    $region4: #{tpu_custom_call.1} parent=1 // pred_region
      %s18 = ssub.s32 1024, 1024
      %19 = vsyncadd [#allocation6], %s18
      %s20 = sshll.u32 [#allocation5], 4
      %s21 = int_to_ptr.vmem [resolvable:$true] %s20
      %26 = dma.hbm_to_vmem [thread:$0]  %s0, 1024, %s21, [#allocation6], 128, 128, 8
    $region5: #{tpu_custom_call.1} parent=1 // pred_fallthru
      _
    // Predicated region
    $region6: #{tpu_custom_call.1} parent=1 // pred_check
      _
    $region7: #{tpu_custom_call.1} parent=1 // pred_check_branch
      %28 = sbr.rel (0) target = $region9
    $region8: #{tpu_custom_call.1} parent=1 // pred_region
      %s30 = ssub.s32 2048, 2048
      %31 = vsyncadd [#allocation9], %s30
      %s32 = sshll.u32 [#allocation8], 4
      %s33 = int_to_ptr.vmem [resolvable:$true] %s32
      %38 = dma.hbm_to_vmem [thread:$0]  %s1, 2048, %s33, [#allocation9], 128, 128, 8
    $region9: #{tpu_custom_call.1} parent=1 // pred_fallthru
      _
    // Predicated region
    $region10: #{tpu_custom_call.1} parent=1 // pred_check
      _
    $region11: #{tpu_custom_call.1} parent=1 // pred_check_branch
      %40 = sbr.rel (0) target = $region13
    $region12: #{tpu_custom_call.1} parent=1 // pred_region
      %s42 = ssub.s32 2048, 2048
      %43 = vsyncadd [#allocation9], %s42
      %s44 = sshll.u32 [#allocation10], 4
      %s45 = int_to_ptr.vmem [resolvable:$true] %s44
      %50 = dma.hbm_to_vmem [thread:$0]  %s2, 2048, %s45, [#allocation9], 128, 128, 8
    $region13: #{tpu_custom_call.1} parent=1 // pred_fallthru
      _
    // Predicated region
    $region14: #{tpu_custom_call.1} parent=1 // pred_check
      _
    $region15: #{tpu_custom_call.1} parent=1 // pred_check_branch
      %52 = sbr.rel (0) target = $region17
    $region16: #{tpu_custom_call.1} parent=1 // pred_region
      _
    $region17: #{tpu_custom_call.1} parent=1 // pred_fallthru
      _
    // Predicated region
    $region18: #{tpu_custom_call.1} parent=1 // pred_check
      _
    $region19: #{tpu_custom_call.1} parent=1 // pred_check_branch
      %54 = sbr.rel (0) target = $region21
    $region20: #{tpu_custom_call.1} parent=1 // pred_region
      %s56 = ssub.s32 2048, 2048
      %57 = vsyncadd [#allocation12], %s56
      %s58 = sshll.u32 [#allocation11], 4
      %s59 = int_to_ptr.vmem [resolvable:$true] %s58
      %64 = dma.hbm_to_vmem [thread:$0]  %s4, 2048, %s59, [#allocation12], 128, 128, 8
    $region21: #{tpu_custom_call.1} parent=1 // pred_fallthru
      _
    // Predicated region
    $region22: #{tpu_custom_call.1} parent=1 // pred_check
      _
    $region23: #{tpu_custom_call.1} parent=1 // pred_check_branch
      %66 = sbr.rel (0) target = $region25
    $region24: #{tpu_custom_call.1} parent=1 // pred_region
      _
    $region25: #{tpu_custom_call.1} parent=1 // pred_fallthru
      _
    // Predicated region
    $region26: #{tpu_custom_call.1} parent=1 // pred_check
      _
    $region27: #{tpu_custom_call.1} parent=1 // pred_check_branch
      %68 = sbr.rel (0) target = $region29
    $region28: #{tpu_custom_call.1} parent=1 // pred_region
      %69 = dma.done [#allocation6], 1024
    $region29: #{tpu_custom_call.1} parent=1 // pred_fallthru
      _
    // Predicated region
    $region30: #{tpu_custom_call.1} parent=1 // pred_check
      _
    $region31: #{tpu_custom_call.1} parent=1 // pred_check_branch
      %71 = sbr.rel (0) target = $region33
    $region32: #{tpu_custom_call.1} parent=1 // pred_region
      %72 = dma.done [#allocation9], 2048
    $region33: #{tpu_custom_call.1} parent=1 // pred_fallthru
      _
    // Predicated region
    $region34: #{tpu_custom_call.1} parent=1 // pred_check
      _
    $region35: #{tpu_custom_call.1} parent=1 // pred_check_branch
      %74 = sbr.rel (0) target = $region37
    $region36: #{tpu_custom_call.1} parent=1 // pred_region
      %75 = dma.done [#allocation9], 2048
    $region37: #{tpu_custom_call.1} parent=1 // pred_fallthru
      _
    // Predicated region
    $region38: #{tpu_custom_call.1} parent=1 // pred_check
      _
    $region39: #{tpu_custom_call.1} parent=1 // pred_check_branch
      %77 = sbr.rel (0) target = $region41
    $region40: #{tpu_custom_call.1} parent=1 // pred_region
      %78 = dma.done [#allocation12], 2048
    $region41: #{tpu_custom_call.1} parent=1 // pred_fallthru
      _
    %p79 = scmp.eq.s32.totalorder 0, 0
    // Predicated region
    $region42: #{tpu_custom_call.1} parent=1 // pred_check
      %p80 = pneg %p79
    $region43: #{tpu_custom_call.1} parent=1 // pred_check_branch
      %82 = sbr.rel (%p80) target = $region45
    $region44: #{tpu_custom_call.1} parent=1 // pred_region
      %83 = vst [vmem:[#allocation2] sm:$0xff] 0.0
      %84 = vst [vmem:[#allocation3] sm:$0xff] -2.0
    $region45: #{tpu_custom_call.1} parent=1 // pred_fallthru
      _
    %v85 = vld [vmem:[#allocation10] sm:$0xff]
    %v86 = vld [vmem:[#allocation10 + $0x8] sm:$0xff]
    %v87 = vld [vmem:[#allocation10 + $0x10] sm:$0xff]
    %v88 = vld [vmem:[#allocation10 + $0x18] sm:$0xff]
    %v89 = vld [vmem:[#allocation10 + $0x20] sm:$0xff]
    %v90 = vld [vmem:[#allocation10 + $0x28] sm:$0xff]
    %v91 = vld [vmem:[#allocation10 + $0x30] sm:$0xff]
    %v92 = vld [vmem:[#allocation10 + $0x38] sm:$0xff]
    %v93 = vld [vmem:[#allocation10 + $0x40] sm:$0xff]
    %v94 = vld [vmem:[#allocation10 + $0x48] sm:$0xff]
    %v95 = vld [vmem:[#allocation10 + $0x50] sm:$0xff]
    %v96 = vld [vmem:[#allocation10 + $0x58] sm:$0xff]
    %v97 = vld [vmem:[#allocation10 + $0x60] sm:$0xff]
    %v98 = vld [vmem:[#allocation10 + $0x68] sm:$0xff]
    %v99 = vld [vmem:[#allocation10 + $0x70] sm:$0xff]
    %v100 = vld [vmem:[#allocation10 + $0x78] sm:$0xff]
    %v101 = vld [vmem:[%s3] sm:$0x1]
    %v102 = vld [vmem:[#allocation5] sm:$0xff]
    %v103 = vld [vmem:[#allocation5 + $0x8] sm:$0xff]
    %v104 = vld [vmem:[#allocation5 + $0x10] sm:$0xff]
    %v105 = vld [vmem:[#allocation5 + $0x18] sm:$0xff]
    %v106 = vld [vmem:[#allocation5 + $0x20] sm:$0xff]
    %v107 = vld [vmem:[#allocation5 + $0x28] sm:$0xff]
    %v108 = vld [vmem:[#allocation5 + $0x30] sm:$0xff]
    %v109 = vld [vmem:[#allocation5 + $0x38] sm:$0xff]
    %v110 = vld [vmem:[#allocation8] sm:$0xff]
    %v111 = vld [vmem:[#allocation8 + $0x8] sm:$0xff]
    %v112 = vld [vmem:[#allocation8 + $0x10] sm:$0xff]
    %v113 = vld [vmem:[#allocation8 + $0x18] sm:$0xff]
    %v114 = vld [vmem:[#allocation8 + $0x20] sm:$0xff]
    %v115 = vld [vmem:[#allocation8 + $0x28] sm:$0xff]
    %v116 = vld [vmem:[#allocation8 + $0x30] sm:$0xff]
    %v117 = vld [vmem:[#allocation8 + $0x38] sm:$0xff]
    %v118 = vld [vmem:[#allocation8 + $0x40] sm:$0xff]
    %v119 = vld [vmem:[#allocation8 + $0x48] sm:$0xff]
    %v120 = vld [vmem:[#allocation8 + $0x50] sm:$0xff]
    %v121 = vld [vmem:[#allocation8 + $0x58] sm:$0xff]
    %v122 = vld [vmem:[#allocation8 + $0x60] sm:$0xff]
    %v123 = vld [vmem:[#allocation8 + $0x68] sm:$0xff]
    %v124 = vld [vmem:[#allocation8 + $0x70] sm:$0xff]
    %v125 = vld [vmem:[#allocation8 + $0x78] sm:$0xff]
    %v127 = vlaneseq
    %v128 = vshrl.u32 %v127, 7
    %v129 = vsub.s32 0, %v128
    %v130 = vrot.slane %v101, %v129
    %132 = vmatprep.subr.mxu0 0.0
    %133 = vmatpush1.msra.mxu0 %v110
    %134 = vmatprep.subr.mxu0 0.0
    %135 = vmatpush1.msra.mxu0 %v111
    %136 = vmatprep.subr.mxu0 0.0
    %137 = vmatpush1.msra.mxu0 %v112
    %138 = vmatprep.subr.mxu0 0.0
    %139 = vmatpush1.msra.mxu0 %v113
    %140 = vmatprep.subr.mxu0 0.0
    %141 = vmatpush1.msra.mxu0 %v114
    %142 = vmatprep.subr.mxu0 0.0
    %143 = vmatpush1.msra.mxu0 %v115
    %144 = vmatprep.subr.mxu0 0.0
    %145 = vmatpush1.msra.mxu0 %v116
    %146 = vmatprep.subr.mxu0 0.0
    %147 = vmatpush1.msra.mxu0 %v117
    %148 = vmatprep.subr.mxu0 0.0
    %149 = vmatpush1.msra.mxu0 %v118
    %150 = vmatprep.subr.mxu0 0.0
    %151 = vmatpush1.msra.mxu0 %v119
    %152 = vmatprep.subr.mxu0 0.0
    %153 = vmatpush1.msra.mxu0 %v120
    %154 = vmatprep.subr.mxu0 0.0
    %155 = vmatpush1.msra.mxu0 %v121
    %156 = vmatprep.subr.mxu0 0.0
    %157 = vmatpush1.msra.mxu0 %v122
    %158 = vmatprep.subr.mxu0 0.0
    %159 = vmatpush1.msra.mxu0 %v123
    %160 = vmatprep.subr.mxu0 0.0
    %161 = vmatpush1.msra.mxu0 %v124
    %162 = vmatprep.subr.mxu0 0.0
    %163 = vmatpush1.msra.mxu0 %v125
    %164 = vmatprep.subr.mxu0 0.0
    %165 = vmatpush1.msra.mxu0 0.0
    %166 = vmatprep.subr.mxu0 0.0
    %167 = vmatpush1.msra.mxu0 0.0
    %168 = vmatprep.subr.mxu0 0.0
    %169 = vmatpush1.msra.mxu0 0.0
    %170 = vmatprep.subr.mxu0 0.0
    %171 = vmatpush1.msra.mxu0 0.0
    %172 = vmatprep.subr.mxu0 0.0
    %173 = vmatpush1.msra.mxu0 0.0
    %174 = vmatprep.subr.mxu0 0.0
    %175 = vmatpush1.msra.mxu0 0.0
    %176 = vmatprep.subr.mxu0 0.0
    %177 = vmatpush1.msra.mxu0 0.0
    %178 = vmatprep.subr.mxu0 0.0
    %179 = vmatpush1.msra.mxu0 0.0
    %180 = vmatprep.subr.mxu0 0.0
    %181 = vmatpush1.msra.mxu0 0.0
    %182 = vmatprep.subr.mxu0 0.0
    %183 = vmatpush1.msra.mxu0 0.0
    %184 = vmatprep.subr.mxu0 0.0
    %185 = vmatpush1.msra.mxu0 0.0
    %186 = vmatprep.subr.mxu0 0.0
    %187 = vmatpush1.msra.mxu0 0.0
    %188 = vmatprep.subr.mxu0 0.0
    %189 = vmatpush1.msra.mxu0 0.0
    %190 = vmatprep.subr.mxu0 0.0
    %191 = vmatpush1.msra.mxu0 0.0
    %192 = vmatprep.subr.mxu0 0.0
    %193 = vmatpush1.msra.mxu0 0.0
    %194 = vmatprep.subr.mxu0 0.0
    %195 = vmatpush1.msra.mxu0 0.0
    %196 = vmatprep.mubr.f32.mxu0 0.0
    %197 = vmatmul.mubr.f32.gmra.mrb[0].mxu0 %v102
    %v198 = vpop.f32.mrb[0].mxu0
    %v199 = vadd.f32 %v130, %v198
    %v200 = vpop.f32.mrb[0].mxu0
    %201 = vmatprep.mubr.f32.mxu0 0.0
    %202 = vmatmul.mubr.f32.gmra.mrb[0].mxu0 %v103
    %v203 = vpop.f32.mrb[0].mxu0
    %v204 = vadd.f32 %v130, %v203
    %v205 = vpop.f32.mrb[0].mxu0
    %206 = vmatprep.mubr.f32.mxu0 0.0
    %207 = vmatmul.mubr.f32.gmra.mrb[0].mxu0 %v104
    %v208 = vpop.f32.mrb[0].mxu0
    %v209 = vadd.f32 %v130, %v208
    %v210 = vpop.f32.mrb[0].mxu0
    %211 = vmatprep.mubr.f32.mxu0 0.0
    %212 = vmatmul.mubr.f32.gmra.mrb[0].mxu0 %v105
    %v213 = vpop.f32.mrb[0].mxu0
    %v214 = vadd.f32 %v130, %v213
    %v215 = vpop.f32.mrb[0].mxu0
    %216 = vmatprep.mubr.f32.mxu0 0.0
    %217 = vmatmul.mubr.f32.gmra.mrb[0].mxu0 %v106
    %v218 = vpop.f32.mrb[0].mxu0
    %v219 = vadd.f32 %v130, %v218
    %v220 = vpop.f32.mrb[0].mxu0
    %221 = vmatprep.mubr.f32.mxu0 0.0
    %222 = vmatmul.mubr.f32.gmra.mrb[0].mxu0 %v107
    %v223 = vpop.f32.mrb[0].mxu0
    %v224 = vadd.f32 %v130, %v223
    %v225 = vpop.f32.mrb[0].mxu0
    %226 = vmatprep.mubr.f32.mxu0 0.0
    %227 = vmatmul.mubr.f32.gmra.mrb[0].mxu0 %v108
    %v228 = vpop.f32.mrb[0].mxu0
    %v229 = vadd.f32 %v130, %v228
    %v230 = vpop.f32.mrb[0].mxu0
    %231 = vmatprep.mubr.f32.mxu0 0.0
    %232 = vmatmul.mubr.f32.gmra.mrb[0].mxu0 %v109
    %v233 = vpop.f32.mrb[0].mxu0
    %v234 = vadd.f32 %v130, %v233
    %v235 = vpop.f32.mrb[0].mxu0
    %236 = vdwg.mxu0
    %237 = vst [vmem:[#allocation4] sm:$0xff] %v199
    %238 = vst [vmem:[#allocation4 + $0x8] sm:$0xff] %v204
    %239 = vst [vmem:[#allocation4 + $0x10] sm:$0xff] %v209
    %240 = vst [vmem:[#allocation4 + $0x18] sm:$0xff] %v214
    %241 = vst [vmem:[#allocation4 + $0x20] sm:$0xff] %v219
    %242 = vst [vmem:[#allocation4 + $0x28] sm:$0xff] %v224
    %243 = vst [vmem:[#allocation4 + $0x30] sm:$0xff] %v229
    %244 = vst [vmem:[#allocation4 + $0x38] sm:$0xff] %v234
    %v245 = vld [vmem:[#allocation2] sm:$0xff]
    %v246 = vld [vmem:[#allocation3] sm:$0xff]
    %v247 = vld [vmem:[#allocation4] sm:$0xff]
    %248 = vmatprep.subr.mxu0 0.0
    %249 = vmatpush1.msra.mxu0 %v85
    %250 = vmatprep.subr.mxu0 0.0
    %251 = vmatpush1.msra.mxu0 %v86
    %252 = vmatprep.subr.mxu0 0.0
    %253 = vmatpush1.msra.mxu0 %v87
    %254 = vmatprep.subr.mxu0 0.0
    %255 = vmatpush1.msra.mxu0 %v88
    %256 = vmatprep.subr.mxu0 0.0
    %257 = vmatpush1.msra.mxu0 %v89
    %258 = vmatprep.subr.mxu0 0.0
    %259 = vmatpush1.msra.mxu0 %v90
    %260 = vmatprep.subr.mxu0 0.0
    %261 = vmatpush1.msra.mxu0 %v91
    %262 = vmatprep.subr.mxu0 0.0
    %263 = vmatpush1.msra.mxu0 %v92
    %264 = vmatprep.subr.mxu0 0.0
    %265 = vmatpush1.msra.mxu0 %v93
    %266 = vmatprep.subr.mxu0 0.0
    %267 = vmatpush1.msra.mxu0 %v94
    %268 = vmatprep.subr.mxu0 0.0
    %269 = vmatpush1.msra.mxu0 %v95
    %270 = vmatprep.subr.mxu0 0.0
    %271 = vmatpush1.msra.mxu0 %v96
    %272 = vmatprep.subr.mxu0 0.0
    %273 = vmatpush1.msra.mxu0 %v97
    %274 = vmatprep.subr.mxu0 0.0
    %275 = vmatpush1.msra.mxu0 %v98
    %276 = vmatprep.subr.mxu0 0.0
    %277 = vmatpush1.msra.mxu0 %v99
    %278 = vmatprep.subr.mxu0 0.0
    %279 = vmatpush1.msra.mxu0 %v100
    %280 = vmatprep.subr.mxu0 0.0
    %281 = vmatpush1.msra.mxu0 0.0
    %282 = vmatprep.subr.mxu0 0.0
    %283 = vmatpush1.msra.mxu0 0.0
    %284 = vmatprep.subr.mxu0 0.0
    %285 = vmatpush1.msra.mxu0 0.0
    %286 = vmatprep.subr.mxu0 0.0
    %287 = vmatpush1.msra.mxu0 0.0
    %288 = vmatprep.subr.mxu0 0.0
    %289 = vmatpush1.msra.mxu0 0.0
    %290 = vmatprep.subr.mxu0 0.0
    %291 = vmatpush1.msra.mxu0 0.0
    %292 = vmatprep.subr.mxu0 0.0
    %293 = vmatpush1.msra.mxu0 0.0
    %294 = vmatprep.subr.mxu0 0.0
    %295 = vmatpush1.msra.mxu0 0.0
    %296 = vmatprep.subr.mxu0 0.0
    %297 = vmatpush1.msra.mxu0 0.0
    %298 = vmatprep.subr.mxu0 0.0
    %299 = vmatpush1.msra.mxu0 0.0
    %300 = vmatprep.subr.mxu0 0.0
    %301 = vmatpush1.msra.mxu0 0.0
    %302 = vmatprep.subr.mxu0 0.0
    %303 = vmatpush1.msra.mxu0 0.0
    %304 = vmatprep.subr.mxu0 0.0
    %305 = vmatpush1.msra.mxu0 0.0
    %306 = vmatprep.subr.mxu0 0.0
    %307 = vmatpush1.msra.mxu0 0.0
    %308 = vmatprep.subr.mxu0 0.0
    %309 = vmatpush1.msra.mxu0 0.0
    %310 = vmatprep.subr.mxu0 0.0
    %311 = vmatpush1.msra.mxu0 0.0
    %312 = vmatprep.mubr.f32.mxu0 0.0
    %313 = vmatmul.mubr.f32.gmra.mrb[0].mxu0 %v245
    %v314 = vpop.f32.mrb[0].mxu0
    %v315 = vadd.f32 0.0, %v314
    %v316 = vpop.f32.mrb[0].mxu0
    %317 = vdwg.mxu0
    %v318 = vadd.f32 %v247, %v315
    %v319 = vtanh.pop %v318
    %v320 = vmax.f32 %v246, %v319
    %s321 = scalar_lea.vmem [#allocation4], 8
    %v322 = vld [vmem:[%s321] sm:$0xff]
    %323 = vmatprep.subr.mxu0 0.0
    %324 = vmatpush1.msra.mxu0 %v85
    %325 = vmatprep.subr.mxu0 0.0
    %326 = vmatpush1.msra.mxu0 %v86
    %327 = vmatprep.subr.mxu0 0.0
    %328 = vmatpush1.msra.mxu0 %v87
    %329 = vmatprep.subr.mxu0 0.0
    %330 = vmatpush1.msra.mxu0 %v88
    %331 = vmatprep.subr.mxu0 0.0
    %332 = vmatpush1.msra.mxu0 %v89
    %333 = vmatprep.subr.mxu0 0.0
    %334 = vmatpush1.msra.mxu0 %v90
    %335 = vmatprep.subr.mxu0 0.0
    %336 = vmatpush1.msra.mxu0 %v91
    %337 = vmatprep.subr.mxu0 0.0
    %338 = vmatpush1.msra.mxu0 %v92
    %339 = vmatprep.subr.mxu0 0.0
    %340 = vmatpush1.msra.mxu0 %v93
    %341 = vmatprep.subr.mxu0 0.0
    %342 = vmatpush1.msra.mxu0 %v94
    %343 = vmatprep.subr.mxu0 0.0
    %344 = vmatpush1.msra.mxu0 %v95
    %345 = vmatprep.subr.mxu0 0.0
    %346 = vmatpush1.msra.mxu0 %v96
    %347 = vmatprep.subr.mxu0 0.0
    %348 = vmatpush1.msra.mxu0 %v97
    %349 = vmatprep.subr.mxu0 0.0
    %350 = vmatpush1.msra.mxu0 %v98
    %351 = vmatprep.subr.mxu0 0.0
    %352 = vmatpush1.msra.mxu0 %v99
    %353 = vmatprep.subr.mxu0 0.0
    %354 = vmatpush1.msra.mxu0 %v100
    %355 = vmatprep.subr.mxu0 0.0
    %356 = vmatpush1.msra.mxu0 0.0
    %357 = vmatprep.subr.mxu0 0.0
    %358 = vmatpush1.msra.mxu0 0.0
    %359 = vmatprep.subr.mxu0 0.0
    %360 = vmatpush1.msra.mxu0 0.0
    %361 = vmatprep.subr.mxu0 0.0
    %362 = vmatpush1.msra.mxu0 0.0
    %363 = vmatprep.subr.mxu0 0.0
    %364 = vmatpush1.msra.mxu0 0.0
    %365 = vmatprep.subr.mxu0 0.0
    %366 = vmatpush1.msra.mxu0 0.0
    %367 = vmatprep.subr.mxu0 0.0
    %368 = vmatpush1.msra.mxu0 0.0
    %369 = vmatprep.subr.mxu0 0.0
    %370 = vmatpush1.msra.mxu0 0.0
    %371 = vmatprep.subr.mxu0 0.0
    %372 = vmatpush1.msra.mxu0 0.0
    %373 = vmatprep.subr.mxu0 0.0
    %374 = vmatpush1.msra.mxu0 0.0
    %375 = vmatprep.subr.mxu0 0.0
    %376 = vmatpush1.msra.mxu0 0.0
    %377 = vmatprep.subr.mxu0 0.0
    %378 = vmatpush1.msra.mxu0 0.0
    %379 = vmatprep.subr.mxu0 0.0
    %380 = vmatpush1.msra.mxu0 0.0
    %381 = vmatprep.subr.mxu0 0.0
    %382 = vmatpush1.msra.mxu0 0.0
    %383 = vmatprep.subr.mxu0 0.0
    %384 = vmatpush1.msra.mxu0 0.0
    %385 = vmatprep.subr.mxu0 0.0
    %386 = vmatpush1.msra.mxu0 0.0
    %387 = vmatprep.mubr.f32.mxu0 0.0
    %388 = vmatmul.mubr.f32.gmra.mrb[0].mxu0 %v319
    %v389 = vpop.f32.mrb[0].mxu0
    %v390 = vadd.f32 0.0, %v389
    %v391 = vpop.f32.mrb[0].mxu0
    %392 = vdwg.mxu0
    %v393 = vadd.f32 %v322, %v390
    %v394 = vtanh.pop %v393
    %v395 = vmax.f32 %v320, %v394
    %s396 = scalar_lea.vmem [#allocation4], 16
    %v397 = vld [vmem:[%s396] sm:$0xff]
    %398 = vmatprep.subr.mxu0 0.0
    %399 = vmatpush1.msra.mxu0 %v85
    %400 = vmatprep.subr.mxu0 0.0
    %401 = vmatpush1.msra.mxu0 %v86
    %402 = vmatprep.subr.mxu0 0.0
    %403 = vmatpush1.msra.mxu0 %v87
    %404 = vmatprep.subr.mxu0 0.0
    %405 = vmatpush1.msra.mxu0 %v88
    %406 = vmatprep.subr.mxu0 0.0
    %407 = vmatpush1.msra.mxu0 %v89
    %408 = vmatprep.subr.mxu0 0.0
    %409 = vmatpush1.msra.mxu0 %v90
    %410 = vmatprep.subr.mxu0 0.0
    %411 = vmatpush1.msra.mxu0 %v91
    %412 = vmatprep.subr.mxu0 0.0
    %413 = vmatpush1.msra.mxu0 %v92
    %414 = vmatprep.subr.mxu0 0.0
    %415 = vmatpush1.msra.mxu0 %v93
    %416 = vmatprep.subr.mxu0 0.0
    %417 = vmatpush1.msra.mxu0 %v94
    %418 = vmatprep.subr.mxu0 0.0
    %419 = vmatpush1.msra.mxu0 %v95
    %420 = vmatprep.subr.mxu0 0.0
    %421 = vmatpush1.msra.mxu0 %v96
    %422 = vmatprep.subr.mxu0 0.0
    %423 = vmatpush1.msra.mxu0 %v97
    %424 = vmatprep.subr.mxu0 0.0
    %425 = vmatpush1.msra.mxu0 %v98
    %426 = vmatprep.subr.mxu0 0.0
    %427 = vmatpush1.msra.mxu0 %v99
    %428 = vmatprep.subr.mxu0 0.0
    %429 = vmatpush1.msra.mxu0 %v100
    %430 = vmatprep.subr.mxu0 0.0
    %431 = vmatpush1.msra.mxu0 0.0
    %432 = vmatprep.subr.mxu0 0.0
    %433 = vmatpush1.msra.mxu0 0.0
    %434 = vmatprep.subr.mxu0 0.0
    %435 = vmatpush1.msra.mxu0 0.0
    %436 = vmatprep.subr.mxu0 0.0
    %437 = vmatpush1.msra.mxu0 0.0
    %438 = vmatprep.subr.mxu0 0.0
    %439 = vmatpush1.msra.mxu0 0.0
    %440 = vmatprep.subr.mxu0 0.0
    %441 = vmatpush1.msra.mxu0 0.0
    %442 = vmatprep.subr.mxu0 0.0
    %443 = vmatpush1.msra.mxu0 0.0
    %444 = vmatprep.subr.mxu0 0.0
    %445 = vmatpush1.msra.mxu0 0.0
    %446 = vmatprep.subr.mxu0 0.0
    %447 = vmatpush1.msra.mxu0 0.0
    %448 = vmatprep.subr.mxu0 0.0
    %449 = vmatpush1.msra.mxu0 0.0
    %450 = vmatprep.subr.mxu0 0.0
    %451 = vmatpush1.msra.mxu0 0.0
    %452 = vmatprep.subr.mxu0 0.0
    %453 = vmatpush1.msra.mxu0 0.0
    %454 = vmatprep.subr.mxu0 0.0
    %455 = vmatpush1.msra.mxu0 0.0
    %456 = vmatprep.subr.mxu0 0.0
    %457 = vmatpush1.msra.mxu0 0.0
    %458 = vmatprep.subr.mxu0 0.0
    %459 = vmatpush1.msra.mxu0 0.0
    %460 = vmatprep.subr.mxu0 0.0
    %461 = vmatpush1.msra.mxu0 0.0
    %462 = vmatprep.mubr.f32.mxu0 0.0
    %463 = vmatmul.mubr.f32.gmra.mrb[0].mxu0 %v394
    %v464 = vpop.f32.mrb[0].mxu0
    %v465 = vadd.f32 0.0, %v464
    %v466 = vpop.f32.mrb[0].mxu0
    %467 = vdwg.mxu0
    %v468 = vadd.f32 %v397, %v465
    %v469 = vtanh.pop %v468
    %v470 = vmax.f32 %v395, %v469
    %s471 = scalar_lea.vmem [#allocation4], 24
    %v472 = vld [vmem:[%s471] sm:$0xff]
    %473 = vmatprep.subr.mxu0 0.0
    %474 = vmatpush1.msra.mxu0 %v85
    %475 = vmatprep.subr.mxu0 0.0
    %476 = vmatpush1.msra.mxu0 %v86
    %477 = vmatprep.subr.mxu0 0.0
    %478 = vmatpush1.msra.mxu0 %v87
    %479 = vmatprep.subr.mxu0 0.0
    %480 = vmatpush1.msra.mxu0 %v88
    %481 = vmatprep.subr.mxu0 0.0
    %482 = vmatpush1.msra.mxu0 %v89
    %483 = vmatprep.subr.mxu0 0.0
    %484 = vmatpush1.msra.mxu0 %v90
    %485 = vmatprep.subr.mxu0 0.0
    %486 = vmatpush1.msra.mxu0 %v91
    %487 = vmatprep.subr.mxu0 0.0
    %488 = vmatpush1.msra.mxu0 %v92
    %489 = vmatprep.subr.mxu0 0.0
    %490 = vmatpush1.msra.mxu0 %v93
    %491 = vmatprep.subr.mxu0 0.0
    %492 = vmatpush1.msra.mxu0 %v94
    %493 = vmatprep.subr.mxu0 0.0
    %494 = vmatpush1.msra.mxu0 %v95
    %495 = vmatprep.subr.mxu0 0.0
    %496 = vmatpush1.msra.mxu0 %v96
    %497 = vmatprep.subr.mxu0 0.0
    %498 = vmatpush1.msra.mxu0 %v97
    %499 = vmatprep.subr.mxu0 0.0
    %500 = vmatpush1.msra.mxu0 %v98
    %501 = vmatprep.subr.mxu0 0.0
    %502 = vmatpush1.msra.mxu0 %v99
    %503 = vmatprep.subr.mxu0 0.0
    %504 = vmatpush1.msra.mxu0 %v100
    %505 = vmatprep.subr.mxu0 0.0
    %506 = vmatpush1.msra.mxu0 0.0
    %507 = vmatprep.subr.mxu0 0.0
    %508 = vmatpush1.msra.mxu0 0.0
    %509 = vmatprep.subr.mxu0 0.0
    %510 = vmatpush1.msra.mxu0 0.0
    %511 = vmatprep.subr.mxu0 0.0
    %512 = vmatpush1.msra.mxu0 0.0
    %513 = vmatprep.subr.mxu0 0.0
    %514 = vmatpush1.msra.mxu0 0.0
    %515 = vmatprep.subr.mxu0 0.0
    %516 = vmatpush1.msra.mxu0 0.0
    %517 = vmatprep.subr.mxu0 0.0
    %518 = vmatpush1.msra.mxu0 0.0
    %519 = vmatprep.subr.mxu0 0.0
    %520 = vmatpush1.msra.mxu0 0.0
    %521 = vmatprep.subr.mxu0 0.0
    %522 = vmatpush1.msra.mxu0 0.0
    %523 = vmatprep.subr.mxu0 0.0
    %524 = vmatpush1.msra.mxu0 0.0
    %525 = vmatprep.subr.mxu0 0.0
    %526 = vmatpush1.msra.mxu0 0.0
    %527 = vmatprep.subr.mxu0 0.0
    %528 = vmatpush1.msra.mxu0 0.0
    %529 = vmatprep.subr.mxu0 0.0
    %530 = vmatpush1.msra.mxu0 0.0
    %531 = vmatprep.subr.mxu0 0.0
    %532 = vmatpush1.msra.mxu0 0.0
    %533 = vmatprep.subr.mxu0 0.0
    %534 = vmatpush1.msra.mxu0 0.0
    %535 = vmatprep.subr.mxu0 0.0
    %536 = vmatpush1.msra.mxu0 0.0
    %537 = vmatprep.mubr.f32.mxu0 0.0
    %538 = vmatmul.mubr.f32.gmra.mrb[0].mxu0 %v469
    %v539 = vpop.f32.mrb[0].mxu0
    %v540 = vadd.f32 0.0, %v539
    %v541 = vpop.f32.mrb[0].mxu0
    %542 = vdwg.mxu0
    %v543 = vadd.f32 %v472, %v540
    %v544 = vtanh.pop %v543
    %v545 = vmax.f32 %v470, %v544
    %s546 = scalar_lea.vmem [#allocation4], 32
    %v547 = vld [vmem:[%s546] sm:$0xff]
    %548 = vmatprep.subr.mxu0 0.0
    %549 = vmatpush1.msra.mxu0 %v85
    %550 = vmatprep.subr.mxu0 0.0
    %551 = vmatpush1.msra.mxu0 %v86
    %552 = vmatprep.subr.mxu0 0.0
    %553 = vmatpush1.msra.mxu0 %v87
    %554 = vmatprep.subr.mxu0 0.0
    %555 = vmatpush1.msra.mxu0 %v88
    %556 = vmatprep.subr.mxu0 0.0
    %557 = vmatpush1.msra.mxu0 %v89
    %558 = vmatprep.subr.mxu0 0.0
    %559 = vmatpush1.msra.mxu0 %v90
    %560 = vmatprep.subr.mxu0 0.0
    %561 = vmatpush1.msra.mxu0 %v91
    %562 = vmatprep.subr.mxu0 0.0
    %563 = vmatpush1.msra.mxu0 %v92
    %564 = vmatprep.subr.mxu0 0.0
    %565 = vmatpush1.msra.mxu0 %v93
    %566 = vmatprep.subr.mxu0 0.0
    %567 = vmatpush1.msra.mxu0 %v94
    %568 = vmatprep.subr.mxu0 0.0
    %569 = vmatpush1.msra.mxu0 %v95
    %570 = vmatprep.subr.mxu0 0.0
    %571 = vmatpush1.msra.mxu0 %v96
    %572 = vmatprep.subr.mxu0 0.0
    %573 = vmatpush1.msra.mxu0 %v97
    %574 = vmatprep.subr.mxu0 0.0
    %575 = vmatpush1.msra.mxu0 %v98
    %576 = vmatprep.subr.mxu0 0.0
    %577 = vmatpush1.msra.mxu0 %v99
    %578 = vmatprep.subr.mxu0 0.0
    %579 = vmatpush1.msra.mxu0 %v100
    %580 = vmatprep.subr.mxu0 0.0
    %581 = vmatpush1.msra.mxu0 0.0
    %582 = vmatprep.subr.mxu0 0.0
    %583 = vmatpush1.msra.mxu0 0.0
    %584 = vmatprep.subr.mxu0 0.0
    %585 = vmatpush1.msra.mxu0 0.0
    %586 = vmatprep.subr.mxu0 0.0
    %587 = vmatpush1.msra.mxu0 0.0
    %588 = vmatprep.subr.mxu0 0.0
    %589 = vmatpush1.msra.mxu0 0.0
    %590 = vmatprep.subr.mxu0 0.0
    %591 = vmatpush1.msra.mxu0 0.0
    %592 = vmatprep.subr.mxu0 0.0
    %593 = vmatpush1.msra.mxu0 0.0
    %594 = vmatprep.subr.mxu0 0.0
    %595 = vmatpush1.msra.mxu0 0.0
    %596 = vmatprep.subr.mxu0 0.0
    %597 = vmatpush1.msra.mxu0 0.0
    %598 = vmatprep.subr.mxu0 0.0
    %599 = vmatpush1.msra.mxu0 0.0
    %600 = vmatprep.subr.mxu0 0.0
    %601 = vmatpush1.msra.mxu0 0.0
    %602 = vmatprep.subr.mxu0 0.0
    %603 = vmatpush1.msra.mxu0 0.0
    %604 = vmatprep.subr.mxu0 0.0
    %605 = vmatpush1.msra.mxu0 0.0
    %606 = vmatprep.subr.mxu0 0.0
    %607 = vmatpush1.msra.mxu0 0.0
    %608 = vmatprep.subr.mxu0 0.0
    %609 = vmatpush1.msra.mxu0 0.0
    %610 = vmatprep.subr.mxu0 0.0
    %611 = vmatpush1.msra.mxu0 0.0
    %612 = vmatprep.mubr.f32.mxu0 0.0
    %613 = vmatmul.mubr.f32.gmra.mrb[0].mxu0 %v544
    %v614 = vpop.f32.mrb[0].mxu0
    %v615 = vadd.f32 0.0, %v614
    %v616 = vpop.f32.mrb[0].mxu0
    %617 = vdwg.mxu0
    %v618 = vadd.f32 %v547, %v615
    %v619 = vtanh.pop %v618
    %v620 = vmax.f32 %v545, %v619
    %s621 = scalar_lea.vmem [#allocation4], 40
    %v622 = vld [vmem:[%s621] sm:$0xff]
    %623 = vmatprep.subr.mxu0 0.0
    %624 = vmatpush1.msra.mxu0 %v85
    %625 = vmatprep.subr.mxu0 0.0
    %626 = vmatpush1.msra.mxu0 %v86
    %627 = vmatprep.subr.mxu0 0.0
    %628 = vmatpush1.msra.mxu0 %v87
    %629 = vmatprep.subr.mxu0 0.0
    %630 = vmatpush1.msra.mxu0 %v88
    %631 = vmatprep.subr.mxu0 0.0
    %632 = vmatpush1.msra.mxu0 %v89
    %633 = vmatprep.subr.mxu0 0.0
    %634 = vmatpush1.msra.mxu0 %v90
    %635 = vmatprep.subr.mxu0 0.0
    %636 = vmatpush1.msra.mxu0 %v91
    %637 = vmatprep.subr.mxu0 0.0
    %638 = vmatpush1.msra.mxu0 %v92
    %639 = vmatprep.subr.mxu0 0.0
    %640 = vmatpush1.msra.mxu0 %v93
    %641 = vmatprep.subr.mxu0 0.0
    %642 = vmatpush1.msra.mxu0 %v94
    %643 = vmatprep.subr.mxu0 0.0
    %644 = vmatpush1.msra.mxu0 %v95
    %645 = vmatprep.subr.mxu0 0.0
    %646 = vmatpush1.msra.mxu0 %v96
    %647 = vmatprep.subr.mxu0 0.0
    %648 = vmatpush1.msra.mxu0 %v97
    %649 = vmatprep.subr.mxu0 0.0
    %650 = vmatpush1.msra.mxu0 %v98
    %651 = vmatprep.subr.mxu0 0.0
    %652 = vmatpush1.msra.mxu0 %v99
    %653 = vmatprep.subr.mxu0 0.0
    %654 = vmatpush1.msra.mxu0 %v100
    %655 = vmatprep.subr.mxu0 0.0
    %656 = vmatpush1.msra.mxu0 0.0
    %657 = vmatprep.subr.mxu0 0.0
    %658 = vmatpush1.msra.mxu0 0.0
    %659 = vmatprep.subr.mxu0 0.0
    %660 = vmatpush1.msra.mxu0 0.0
    %661 = vmatprep.subr.mxu0 0.0
    %662 = vmatpush1.msra.mxu0 0.0
    %663 = vmatprep.subr.mxu0 0.0
    %664 = vmatpush1.msra.mxu0 0.0
    %665 = vmatprep.subr.mxu0 0.0
    %666 = vmatpush1.msra.mxu0 0.0
    %667 = vmatprep.subr.mxu0 0.0
    %668 = vmatpush1.msra.mxu0 0.0
    %669 = vmatprep.subr.mxu0 0.0
    %670 = vmatpush1.msra.mxu0 0.0
    %671 = vmatprep.subr.mxu0 0.0
    %672 = vmatpush1.msra.mxu0 0.0
    %673 = vmatprep.subr.mxu0 0.0
    %674 = vmatpush1.msra.mxu0 0.0
    %675 = vmatprep.subr.mxu0 0.0
    %676 = vmatpush1.msra.mxu0 0.0
    %677 = vmatprep.subr.mxu0 0.0
    %678 = vmatpush1.msra.mxu0 0.0
    %679 = vmatprep.subr.mxu0 0.0
    %680 = vmatpush1.msra.mxu0 0.0
    %681 = vmatprep.subr.mxu0 0.0
    %682 = vmatpush1.msra.mxu0 0.0
    %683 = vmatprep.subr.mxu0 0.0
    %684 = vmatpush1.msra.mxu0 0.0
    %685 = vmatprep.subr.mxu0 0.0
    %686 = vmatpush1.msra.mxu0 0.0
    %687 = vmatprep.mubr.f32.mxu0 0.0
    %688 = vmatmul.mubr.f32.gmra.mrb[0].mxu0 %v619
    %v689 = vpop.f32.mrb[0].mxu0
    %v690 = vadd.f32 0.0, %v689
    %v691 = vpop.f32.mrb[0].mxu0
    %692 = vdwg.mxu0
    %v693 = vadd.f32 %v622, %v690
    %v694 = vtanh.pop %v693
    %v695 = vmax.f32 %v620, %v694
    %s696 = scalar_lea.vmem [#allocation4], 48
    %v697 = vld [vmem:[%s696] sm:$0xff]
    %698 = vmatprep.subr.mxu0 0.0
    %699 = vmatpush1.msra.mxu0 %v85
    %700 = vmatprep.subr.mxu0 0.0
    %701 = vmatpush1.msra.mxu0 %v86
    %702 = vmatprep.subr.mxu0 0.0
    %703 = vmatpush1.msra.mxu0 %v87
    %704 = vmatprep.subr.mxu0 0.0
    %705 = vmatpush1.msra.mxu0 %v88
    %706 = vmatprep.subr.mxu0 0.0
    %707 = vmatpush1.msra.mxu0 %v89
    %708 = vmatprep.subr.mxu0 0.0
    %709 = vmatpush1.msra.mxu0 %v90
    %710 = vmatprep.subr.mxu0 0.0
    %711 = vmatpush1.msra.mxu0 %v91
    %712 = vmatprep.subr.mxu0 0.0
    %713 = vmatpush1.msra.mxu0 %v92
    %714 = vmatprep.subr.mxu0 0.0
    %715 = vmatpush1.msra.mxu0 %v93
    %716 = vmatprep.subr.mxu0 0.0
    %717 = vmatpush1.msra.mxu0 %v94
    %718 = vmatprep.subr.mxu0 0.0
    %719 = vmatpush1.msra.mxu0 %v95
    %720 = vmatprep.subr.mxu0 0.0
    %721 = vmatpush1.msra.mxu0 %v96
    %722 = vmatprep.subr.mxu0 0.0
    %723 = vmatpush1.msra.mxu0 %v97
    %724 = vmatprep.subr.mxu0 0.0
    %725 = vmatpush1.msra.mxu0 %v98
    %726 = vmatprep.subr.mxu0 0.0
    %727 = vmatpush1.msra.mxu0 %v99
    %728 = vmatprep.subr.mxu0 0.0
    %729 = vmatpush1.msra.mxu0 %v100
    %730 = vmatprep.subr.mxu0 0.0
    %731 = vmatpush1.msra.mxu0 0.0
    %732 = vmatprep.subr.mxu0 0.0
    %733 = vmatpush1.msra.mxu0 0.0
    %734 = vmatprep.subr.mxu0 0.0
    %735 = vmatpush1.msra.mxu0 0.0
    %736 = vmatprep.subr.mxu0 0.0
    %737 = vmatpush1.msra.mxu0 0.0
    %738 = vmatprep.subr.mxu0 0.0
    %739 = vmatpush1.msra.mxu0 0.0
    %740 = vmatprep.subr.mxu0 0.0
    %741 = vmatpush1.msra.mxu0 0.0
    %742 = vmatprep.subr.mxu0 0.0
    %743 = vmatpush1.msra.mxu0 0.0
    %744 = vmatprep.subr.mxu0 0.0
    %745 = vmatpush1.msra.mxu0 0.0
    %746 = vmatprep.subr.mxu0 0.0
    %747 = vmatpush1.msra.mxu0 0.0
    %748 = vmatprep.subr.mxu0 0.0
    %749 = vmatpush1.msra.mxu0 0.0
    %750 = vmatprep.subr.mxu0 0.0
    %751 = vmatpush1.msra.mxu0 0.0
    %752 = vmatprep.subr.mxu0 0.0
    %753 = vmatpush1.msra.mxu0 0.0
    %754 = vmatprep.subr.mxu0 0.0
    %755 = vmatpush1.msra.mxu0 0.0
    %756 = vmatprep.subr.mxu0 0.0
    %757 = vmatpush1.msra.mxu0 0.0
    %758 = vmatprep.subr.mxu0 0.0
    %759 = vmatpush1.msra.mxu0 0.0
    %760 = vmatprep.subr.mxu0 0.0
    %761 = vmatpush1.msra.mxu0 0.0
    %762 = vmatprep.mubr.f32.mxu0 0.0
    %763 = vmatmul.mubr.f32.gmra.mrb[0].mxu0 %v694
    %v764 = vpop.f32.mrb[0].mxu0
    %v765 = vadd.f32 0.0, %v764
    %v766 = vpop.f32.mrb[0].mxu0
    %767 = vdwg.mxu0
    %v768 = vadd.f32 %v697, %v765
    %v769 = vtanh.pop %v768
    %v770 = vmax.f32 %v695, %v769
    %s771 = scalar_lea.vmem [#allocation4], 56
    %v772 = vld [vmem:[%s771] sm:$0xff]
    %773 = vmatprep.subr.mxu0 0.0
    %774 = vmatpush1.msra.mxu0 %v85
    %775 = vmatprep.subr.mxu0 0.0
    %776 = vmatpush1.msra.mxu0 %v86
    %777 = vmatprep.subr.mxu0 0.0
    %778 = vmatpush1.msra.mxu0 %v87
    %779 = vmatprep.subr.mxu0 0.0
    %780 = vmatpush1.msra.mxu0 %v88
    %781 = vmatprep.subr.mxu0 0.0
    %782 = vmatpush1.msra.mxu0 %v89
    %783 = vmatprep.subr.mxu0 0.0
    %784 = vmatpush1.msra.mxu0 %v90
    %785 = vmatprep.subr.mxu0 0.0
    %786 = vmatpush1.msra.mxu0 %v91
    %787 = vmatprep.subr.mxu0 0.0
    %788 = vmatpush1.msra.mxu0 %v92
    %789 = vmatprep.subr.mxu0 0.0
    %790 = vmatpush1.msra.mxu0 %v93
    %791 = vmatprep.subr.mxu0 0.0
    %792 = vmatpush1.msra.mxu0 %v94
    %793 = vmatprep.subr.mxu0 0.0
    %794 = vmatpush1.msra.mxu0 %v95
    %795 = vmatprep.subr.mxu0 0.0
    %796 = vmatpush1.msra.mxu0 %v96
    %797 = vmatprep.subr.mxu0 0.0
    %798 = vmatpush1.msra.mxu0 %v97
    %799 = vmatprep.subr.mxu0 0.0
    %800 = vmatpush1.msra.mxu0 %v98
    %801 = vmatprep.subr.mxu0 0.0
    %802 = vmatpush1.msra.mxu0 %v99
    %803 = vmatprep.subr.mxu0 0.0
    %804 = vmatpush1.msra.mxu0 %v100
    %805 = vmatprep.subr.mxu0 0.0
    %806 = vmatpush1.msra.mxu0 0.0
    %807 = vmatprep.subr.mxu0 0.0
    %808 = vmatpush1.msra.mxu0 0.0
    %809 = vmatprep.subr.mxu0 0.0
    %810 = vmatpush1.msra.mxu0 0.0
    %811 = vmatprep.subr.mxu0 0.0
    %812 = vmatpush1.msra.mxu0 0.0
    %813 = vmatprep.subr.mxu0 0.0
    %814 = vmatpush1.msra.mxu0 0.0
    %815 = vmatprep.subr.mxu0 0.0
    %816 = vmatpush1.msra.mxu0 0.0
    %817 = vmatprep.subr.mxu0 0.0
    %818 = vmatpush1.msra.mxu0 0.0
    %819 = vmatprep.subr.mxu0 0.0
    %820 = vmatpush1.msra.mxu0 0.0
    %821 = vmatprep.subr.mxu0 0.0
    %822 = vmatpush1.msra.mxu0 0.0
    %823 = vmatprep.subr.mxu0 0.0
    %824 = vmatpush1.msra.mxu0 0.0
    %825 = vmatprep.subr.mxu0 0.0
    %826 = vmatpush1.msra.mxu0 0.0
    %827 = vmatprep.subr.mxu0 0.0
    %828 = vmatpush1.msra.mxu0 0.0
    %829 = vmatprep.subr.mxu0 0.0
    %830 = vmatpush1.msra.mxu0 0.0
    %831 = vmatprep.subr.mxu0 0.0
    %832 = vmatpush1.msra.mxu0 0.0
    %833 = vmatprep.subr.mxu0 0.0
    %834 = vmatpush1.msra.mxu0 0.0
    %835 = vmatprep.subr.mxu0 0.0
    %836 = vmatpush1.msra.mxu0 0.0
    %837 = vmatprep.mubr.f32.mxu0 0.0
    %838 = vmatmul.mubr.f32.gmra.mrb[0].mxu0 %v769
    %v839 = vpop.f32.mrb[0].mxu0
    %v840 = vadd.f32 0.0, %v839
    %v841 = vpop.f32.mrb[0].mxu0
    %842 = vdwg.mxu0
    %v843 = vadd.f32 %v772, %v840
    %v844 = vtanh.pop %v843
    %v845 = vmax.f32 %v770, %v844
    %846 = vst [vmem:[#allocation2] sm:$0xff] %v844
    %847 = vst [vmem:[#allocation3] sm:$0xff] %v845
    // Predicated region
    $region46: #{tpu_custom_call.1} parent=1 // pred_check
      %p848 = pneg %p79
    $region47: #{tpu_custom_call.1} parent=1 // pred_check_branch
      %850 = sbr.rel (%p848) target = $region49
    $region48: #{tpu_custom_call.1} parent=1 // pred_region
      %v851 = vld [vmem:[#allocation11] sm:$0xff]
      %v852 = vld [vmem:[#allocation11 + $0x8] sm:$0xff]
      %v853 = vld [vmem:[#allocation11 + $0x10] sm:$0xff]
      %v854 = vld [vmem:[#allocation11 + $0x18] sm:$0xff]
      %v855 = vld [vmem:[#allocation11 + $0x20] sm:$0xff]
      %v856 = vld [vmem:[#allocation11 + $0x28] sm:$0xff]
      %v857 = vld [vmem:[#allocation11 + $0x30] sm:$0xff]
      %v858 = vld [vmem:[#allocation11 + $0x38] sm:$0xff]
      %v859 = vld [vmem:[#allocation11 + $0x40] sm:$0xff]
      %v860 = vld [vmem:[#allocation11 + $0x48] sm:$0xff]
      %v861 = vld [vmem:[#allocation11 + $0x50] sm:$0xff]
      %v862 = vld [vmem:[#allocation11 + $0x58] sm:$0xff]
      %v863 = vld [vmem:[#allocation11 + $0x60] sm:$0xff]
      %v864 = vld [vmem:[#allocation11 + $0x68] sm:$0xff]
      %v865 = vld [vmem:[#allocation11 + $0x70] sm:$0xff]
      %v866 = vld [vmem:[#allocation11 + $0x78] sm:$0xff]
      %v867 = vld [vmem:[%s5] sm:$0x1]
      %v869 = vlaneseq
      %v870 = vshrl.u32 %v869, 7
      %v871 = vsub.s32 0, %v870
      %v872 = vrot.slane %v867, %v871
      %874 = vmatprep.subr.mxu0 0.0
      %875 = vmatpush1.msra.mxu0 %v851
      %876 = vmatprep.subr.mxu0 0.0
      %877 = vmatpush1.msra.mxu0 %v852
      %878 = vmatprep.subr.mxu0 0.0
      %879 = vmatpush1.msra.mxu0 %v853
      %880 = vmatprep.subr.mxu0 0.0
      %881 = vmatpush1.msra.mxu0 %v854
      %882 = vmatprep.subr.mxu0 0.0
      %883 = vmatpush1.msra.mxu0 %v855
      %884 = vmatprep.subr.mxu0 0.0
      %885 = vmatpush1.msra.mxu0 %v856
      %886 = vmatprep.subr.mxu0 0.0
      %887 = vmatpush1.msra.mxu0 %v857
      %888 = vmatprep.subr.mxu0 0.0
      %889 = vmatpush1.msra.mxu0 %v858
      %890 = vmatprep.subr.mxu0 0.0
      %891 = vmatpush1.msra.mxu0 %v859
      %892 = vmatprep.subr.mxu0 0.0
      %893 = vmatpush1.msra.mxu0 %v860
      %894 = vmatprep.subr.mxu0 0.0
      %895 = vmatpush1.msra.mxu0 %v861
      %896 = vmatprep.subr.mxu0 0.0
      %897 = vmatpush1.msra.mxu0 %v862
      %898 = vmatprep.subr.mxu0 0.0
      %899 = vmatpush1.msra.mxu0 %v863
      %900 = vmatprep.subr.mxu0 0.0
      %901 = vmatpush1.msra.mxu0 %v864
      %902 = vmatprep.subr.mxu0 0.0
      %903 = vmatpush1.msra.mxu0 %v865
      %904 = vmatprep.subr.mxu0 0.0
      %905 = vmatpush1.msra.mxu0 %v866
      %906 = vmatprep.subr.mxu0 0.0
      %907 = vmatpush1.msra.mxu0 0.0
      %908 = vmatprep.subr.mxu0 0.0
      %909 = vmatpush1.msra.mxu0 0.0
      %910 = vmatprep.subr.mxu0 0.0
      %911 = vmatpush1.msra.mxu0 0.0
      %912 = vmatprep.subr.mxu0 0.0
      %913 = vmatpush1.msra.mxu0 0.0
      %914 = vmatprep.subr.mxu0 0.0
      %915 = vmatpush1.msra.mxu0 0.0
      %916 = vmatprep.subr.mxu0 0.0
      %917 = vmatpush1.msra.mxu0 0.0
      %918 = vmatprep.subr.mxu0 0.0
      %919 = vmatpush1.msra.mxu0 0.0
      %920 = vmatprep.subr.mxu0 0.0
      %921 = vmatpush1.msra.mxu0 0.0
      %922 = vmatprep.subr.mxu0 0.0
      %923 = vmatpush1.msra.mxu0 0.0
      %924 = vmatprep.subr.mxu0 0.0
      %925 = vmatpush1.msra.mxu0 0.0
      %926 = vmatprep.subr.mxu0 0.0
      %927 = vmatpush1.msra.mxu0 0.0
      %928 = vmatprep.subr.mxu0 0.0
      %929 = vmatpush1.msra.mxu0 0.0
      %930 = vmatprep.subr.mxu0 0.0
      %931 = vmatpush1.msra.mxu0 0.0
      %932 = vmatprep.subr.mxu0 0.0
      %933 = vmatpush1.msra.mxu0 0.0
      %934 = vmatprep.subr.mxu0 0.0
      %935 = vmatpush1.msra.mxu0 0.0
      %936 = vmatprep.subr.mxu0 0.0
      %937 = vmatpush1.msra.mxu0 0.0
      %938 = vmatprep.mubr.f32.mxu0 0.0
      %939 = vmatmul.mubr.f32.gmra.mrb[0].mxu0 %v845
      %v940 = vpop.f32.mrb[0].mxu0
      %v941 = vadd.f32 %v872, %v940
      %v942 = vpop.f32.mrb[0].mxu0
      %943 = vdwg.mxu0
      %944 = vst [vmem:[#allocation13] sm:$0xff] %v941
    $region49: #{tpu_custom_call.1} parent=1 // pred_fallthru
      _
    // Predicated region
    $region50: #{tpu_custom_call.1} parent=1 // pred_check
      _
    $region51: #{tpu_custom_call.1} parent=1 // pred_check_branch
      %946 = sbr.rel (0) target = $region53
    $region52: #{tpu_custom_call.1} parent=1 // pred_region
      %s948 = ssub.s32 128, 128
      %949 = vsyncadd [#allocation7], %s948
      %s951 = sshll.u32 [#allocation13], 4
      %s952 = int_to_ptr.vmem [resolvable:$true] %s951
      %954 = dma.vmem_to_hbm [thread:$0]  %s952, 128, %s6, [#allocation7]
    $region53: #{tpu_custom_call.1} parent=1 // pred_fallthru
      _
    // Predicated region
    $region54: #{tpu_custom_call.1} parent=1 // pred_check
      _
    $region55: #{tpu_custom_call.1} parent=1 // pred_check_branch
      %956 = sbr.rel (0) target = $region57
    $region56: #{tpu_custom_call.1} parent=1 // pred_region
      %957 = dma.done [#allocation7], 128
    $region57: #{tpu_custom_call.1} parent=1 // pred_fallthru
      _
    %958 = vsyncpa [#allocation6], 1
    %959 = vsyncpa [#allocation9], 1
    %960 = vsyncpa [#allocation12], 1
    %961 = vsyncpa [#allocation7], 1

</llo_original>
